<compile_context>
chip_gen: v7x
topology: tpu7x:2x2x1
jax: 0.10.0
libtpu: 0.0.40
codegen_flags: <defaults>
</compile_context>

<pallas_src>
import functools

import jax
import jax.numpy as jnp
from jax.experimental import pallas as pl
from jax.experimental.pallas import tpu as pltpu


def _round_up(x: int, m: int) -> int:
    return ((x + m - 1) // m) * m


def _fused_mlp_kernel(*refs, num_layers: int, n_classes: int):
    """refs = (x_ref, w1_ref, b1_ref, ..., wN_ref, bN_ref, logits_ref, preds_ref).

    Weights are pre-transposed (Fin, Fout_pad); biases are (1, Fout_pad).
    Hidden layers apply ReLU; the last layer does not.  An argmax over the
    real (unpadded) class lanes is fused as a second output.
    """
    x_ref = refs[0]
    logits_ref = refs[-2]
    preds_ref = refs[-1]

    h = x_ref[...]
    for i in range(num_layers):
        w_ref = refs[1 + 2 * i]
        b_ref = refs[2 + 2 * i]
        # MXU matmul with f32 accumulation, then VPU bias add (+ ReLU).
        y = jnp.dot(h, w_ref[...], preferred_element_type=jnp.float32)
        y = y + b_ref[...]
        if i < num_layers - 1:
            y = jnp.maximum(y, 0.0)
        h = y

    # Lane-dense (padded-to-128) logits store.
    logits_ref[...] = h.astype(logits_ref.dtype)

    # Fused argmax epilogue: mask padded class lanes, then max + first-index
    # tie-break expressed as min-over-matching-columns (no lax.argmax needed).
    col = jax.lax.broadcasted_iota(jnp.int32, h.shape, 1)
    masked = jnp.where(col < n_classes, h, -jnp.inf)
    m = jnp.max(masked, axis=-1, keepdims=True)
    idx = jnp.min(jnp.where(masked == m, col, h.shape[1]), axis=-1, keepdims=True)
    preds_ref[...] = idx.astype(jnp.int32)


def fused_mlp_pallas(x, padded_params, n_classes):
    """Run the whole MLP (+ fused argmax) in one Pallas kernel.

    x:             (B, n_in_feats) f32 — unpadded.
    padded_params: flat tuple (w1, b1, w2, b2, ...) — w: (Fin, Fout_pad),
                   b: (1, Fout_pad); all but the first Fin are 128-padded.
    returns:       (logits_pad (B, Fout_last_pad) f32, preds (B, 1) i32)
    """
    num_layers = len(padded_params) // 2
    b = x.shape[0]
    out_pad = padded_params[-2].shape[1]

    kernel = functools.partial(
        _fused_mlp_kernel, num_layers=num_layers, n_classes=n_classes
    )
    vmem_spec = pl.BlockSpec(memory_space=pltpu.MemorySpace.VMEM)

    return pl.pallas_call(
        kernel,
        out_shape=(
            jax.ShapeDtypeStruct((b, out_pad), jnp.float32),
            jax.ShapeDtypeStruct((b, 1), jnp.int32),
        ),
        in_specs=[vmem_spec] * (1 + len(padded_params)),
        out_specs=(vmem_spec, vmem_spec),
    )(x, *padded_params)


class NeuralNetPallas:
    """JAX/Pallas equivalent of the PyTorch NeuralNet module (forward/predict)."""

    def __init__(self, n_in_feats: int, n_classes: int, hidden_config: list, key):
        self.n_in_feats = n_in_feats
        self.n_classes = n_classes
        self.hidden_config = list(hidden_config)

        dims = [n_in_feats] + self.hidden_config + [n_classes]

        # Torch-convention params (out_features, in_features) — reference only.
        self.params = []
        # Pre-transposed + lane-padded params used by the fused kernel.
        padded = []
        for i in range(len(dims) - 1):
            fan_in, fan_out = dims[i], dims[i + 1]
            key, kw, kb = jax.random.split(key, 3)
            # torch.nn.Linear default init: U(-1/sqrt(fan_in), 1/sqrt(fan_in))
            bound = 1.0 / float(fan_in) ** 0.5
            w = jax.random.uniform(kw, (fan_out, fan_in), jnp.float32, -bound, bound)
            b = jax.random.uniform(kb, (fan_out,), jnp.float32, -bound, bound)
            self.params.append((w, b))

            # Layer 0 keeps its true Fin (no padded rows to DMA); deeper layers'
            # Fin must match the previous layer's padded Fout.
            fin_pad = fan_in if i == 0 else _round_up(fan_in, 128)
            fout_pad = _round_up(fan_out, 128)
            w_pad = jnp.zeros((fin_pad, fout_pad), jnp.float32)
            w_pad = w_pad.at[:fan_in, :fan_out].set(w.T)  # pre-transpose (Fin, Fout)
            b_pad = jnp.zeros((1, fout_pad), jnp.float32)
            b_pad = b_pad.at[0, :fan_out].set(b)
            padded.append(w_pad)
            padded.append(b_pad)

        self.padded_params = tuple(padded)
        # jit once: one dispatch covers the whole fused forward (+ argmax).
        self._jit_forward = jax.jit(self._forward_impl)

    def _forward_impl(self, x, padded_params):
        logits_pad, preds = fused_mlp_pallas(x, padded_params, self.n_classes)
        return logits_pad[:, : self.n_classes], preds[:, 0]

    def forward(self, x):
        logits, _ = self._jit_forward(x, self.padded_params)
        return logits

    def predict(self, x):
        _, preds = self._jit_forward(x, self.padded_params)
        return preds


if __name__ == "__main__":
    key = jax.random.PRNGKey(0)
    k_params, k_x = jax.random.split(key)

    n_in_feats = 32
    n_classes = 10
    hidden_config = [64, 32]
    batch = 8

    model = NeuralNetPallas(n_in_feats, n_classes, hidden_config, k_params)

    x = jax.random.normal(k_x, (batch, n_in_feats), jnp.float32)

    out = jax.block_until_ready(model.forward(x))

    # Reference in plain JAX (same math as torch: x @ W.T + b, ReLU between).
    ref = x
    for w, b in model.params[:-1]:
        ref = jnp.maximum(ref @ w.T + b, 0.0)
    w, b = model.params[-1]
    ref = ref @ w.T + b

    assert out.shape == (batch, n_classes)
    assert jnp.allclose(out, ref, atol=1e-5, rtol=1e-5)

    preds = jax.block_until_ready(model.predict(x))
    assert preds.shape == (batch,)
    assert jnp.array_equal(preds, jnp.argmax(ref, axis=1))

    print("KERNEL_OK")
</pallas_src>

<mosaic_0001>
module attributes {stable_mosaic.version = 11 : i64} {
  func.func @_fused_mlp_kernel(%arg0: memref<8x32xf32, #tpu.memory_space<vmem>>, %arg1: memref<32x128xf32, #tpu.memory_space<vmem>>, %arg2: memref<1x128xf32, #tpu.memory_space<vmem>>, %arg3: memref<128x128xf32, #tpu.memory_space<vmem>>, %arg4: memref<1x128xf32, #tpu.memory_space<vmem>>, %arg5: memref<128x128xf32, #tpu.memory_space<vmem>>, %arg6: memref<1x128xf32, #tpu.memory_space<vmem>>, %arg7: memref<8x128xf32, #tpu.memory_space<vmem>>, %arg8: memref<8x1xi32, #tpu.memory_space<vmem>>) attributes {dimension_semantics = [], scalar_prefetch = 0 : i64, scratch_operands = 0 : i64, tpu.core_type = #tpu.core_type<tc>} {
    %c0 = arith.constant 0 : index
    %c0_0 = arith.constant 0 : index
    %0 = vector.load %arg0[%c0, %c0_0] : memref<8x32xf32, #tpu.memory_space<vmem>>, vector<8x32xf32>
    %c0_1 = arith.constant 0 : index
    %c0_2 = arith.constant 0 : index
    %1 = vector.load %arg1[%c0_1, %c0_2] : memref<32x128xf32, #tpu.memory_space<vmem>>, vector<32x128xf32>
    %cst = arith.constant dense<0.000000e+00> : vector<8x128xf32>
    %2 = tpu.matmul %0, %1, %cst {dimension_numbers = #tpu.dot_dimension_numbers<[1], [0], [0], [1], [0, 0, 1, 1], [], []>} : vector<8x32xf32>, vector<32x128xf32>, vector<8x128xf32> -> vector<8x128xf32>
    %c0_3 = arith.constant 0 : index
    %c0_4 = arith.constant 0 : index
    %3 = vector.load %arg2[%c0_3, %c0_4] : memref<1x128xf32, #tpu.memory_space<vmem>>, vector<1x128xf32>
    %4 = vector.broadcast %3 : vector<1x128xf32> to vector<8x128xf32>
    %5 = arith.addf %2, %4 : vector<8x128xf32>
    %cst_5 = arith.constant 0.000000e+00 : f32
    %6 = vector.broadcast %cst_5 : f32 to vector<8x128xf32>
    %7 = arith.maximumf %5, %6 : vector<8x128xf32>
    %c0_6 = arith.constant 0 : index
    %c0_7 = arith.constant 0 : index
    %8 = vector.load %arg3[%c0_6, %c0_7] : memref<128x128xf32, #tpu.memory_space<vmem>>, vector<128x128xf32>
    %cst_8 = arith.constant dense<0.000000e+00> : vector<8x128xf32>
    %9 = tpu.matmul %7, %8, %cst_8 {dimension_numbers = #tpu.dot_dimension_numbers<[1], [0], [0], [1], [0, 0, 1, 1], [], []>} : vector<8x128xf32>, vector<128x128xf32>, vector<8x128xf32> -> vector<8x128xf32>
    %c0_9 = arith.constant 0 : index
    %c0_10 = arith.constant 0 : index
    %10 = vector.load %arg4[%c0_9, %c0_10] : memref<1x128xf32, #tpu.memory_space<vmem>>, vector<1x128xf32>
    %11 = vector.broadcast %10 : vector<1x128xf32> to vector<8x128xf32>
    %12 = arith.addf %9, %11 : vector<8x128xf32>
    %cst_11 = arith.constant 0.000000e+00 : f32
    %13 = vector.broadcast %cst_11 : f32 to vector<8x128xf32>
    %14 = arith.maximumf %12, %13 : vector<8x128xf32>
    %c0_12 = arith.constant 0 : index
    %c0_13 = arith.constant 0 : index
    %15 = vector.load %arg5[%c0_12, %c0_13] : memref<128x128xf32, #tpu.memory_space<vmem>>, vector<128x128xf32>
    %cst_14 = arith.constant dense<0.000000e+00> : vector<8x128xf32>
    %16 = tpu.matmul %14, %15, %cst_14 {dimension_numbers = #tpu.dot_dimension_numbers<[1], [0], [0], [1], [0, 0, 1, 1], [], []>} : vector<8x128xf32>, vector<128x128xf32>, vector<8x128xf32> -> vector<8x128xf32>
    %c0_15 = arith.constant 0 : index
    %c0_16 = arith.constant 0 : index
    %17 = vector.load %arg6[%c0_15, %c0_16] : memref<1x128xf32, #tpu.memory_space<vmem>>, vector<1x128xf32>
    %18 = vector.broadcast %17 : vector<1x128xf32> to vector<8x128xf32>
    %19 = arith.addf %16, %18 : vector<8x128xf32>
    %c0_17 = arith.constant 0 : index
    %c0_18 = arith.constant 0 : index
    %20 = vector.load %arg7[%c0_17, %c0_18] : memref<8x128xf32, #tpu.memory_space<vmem>>, vector<8x128xf32>
    tpu.vector_store %arg7[%c0_17, %c0_18], %19 {strides = array<i32>} : memref<8x128xf32, #tpu.memory_space<vmem>>, vector<8x128xf32>,
    %21 = tpu.iota {dimensions = array<i32: 1>} : vector<8x128xi32>
    %c10_i32 = arith.constant 10 : i32
    %22 = vector.broadcast %c10_i32 : i32 to vector<8x128xi32>
    %23 = arith.cmpi slt, %21, %22 : vector<8x128xi32>
    %cst_19 = arith.constant 0xFF800000 : f32
    %24 = vector.broadcast %cst_19 : f32 to vector<8x128xf32>
    %25 = arith.select %23, %19, %24 : vector<8x128xi1>, vector<8x128xf32>
    %cst_20 = arith.constant dense<0xFF800000> : vector<8xf32>
    %26 = vector.multi_reduction <maximumf>, %25, %cst_20 [1] : vector<8x128xf32> to vector<8xf32>
    %27 = vector.shape_cast %26 : vector<8xf32> to vector<8x1xf32>
    %28 = vector.broadcast %27 : vector<8x1xf32> to vector<8x128xf32>
    %29 = arith.cmpf oeq, %25, %28 : vector<8x128xf32>
    %c128_i32 = arith.constant 128 : i32
    %30 = vector.broadcast %c128_i32 : i32 to vector<8x128xi32>
    %31 = arith.select %29, %21, %30 : vector<8x128xi1>, vector<8x128xi32>
    %cst_21 = arith.constant dense<2147483647> : vector<8xi32>
    %32 = vector.multi_reduction <minsi>, %31, %cst_21 [1] : vector<8x128xi32> to vector<8xi32>
    %33 = vector.shape_cast %32 : vector<8xi32> to vector<8x1xi32>
    %c0_22 = arith.constant 0 : index
    %c0_23 = arith.constant 0 : index
    %34 = vector.load %arg8[%c0_22, %c0_23] : memref<8x1xi32, #tpu.memory_space<vmem>>, vector<8x1xi32>
    tpu.vector_store %arg8[%c0_22, %c0_23], %33 {strides = array<i32>} : memref<8x1xi32, #tpu.memory_space<vmem>>, vector<8x1xi32>,
    return
  }
}

</mosaic_0001>

<llo_original>
// kernel: _forward_impl.1
$region0: #{_forward_impl.1}
  #allocation0 [shape = 'u32[]', space=smem, size = 0x4, offset = 0x4, fixed_abs, tag = 'smem constant byte address 0x4 - core index']
  #allocation1 [shape = 'u32[144,128]{1,0:T(1,128)}', space=vmem, size = 0x12000, scoped, tag = 'internal scratch']
  %s0 = inlined_call_operand.hbm [shape: f32[8,32], index: 0, kind: input, shape index: {}]
  %s1 = inlined_call_operand.hbm [shape: f32[32,128], index: 1, kind: input, shape index: {}]
  %s2 = inlined_call_operand.vmem [shape: f32[1,128], index: 2, kind: input, shape index: {}]
  %s3 = inlined_call_operand.hbm [shape: f32[128,128], index: 3, kind: input, shape index: {}]
  %s4 = inlined_call_operand.vmem [shape: f32[1,128], index: 4, kind: input, shape index: {}]
  %s5 = inlined_call_operand.hbm [shape: f32[128,128], index: 5, kind: input, shape index: {}]
  %s6 = inlined_call_operand.vmem [shape: f32[1,128], index: 6, kind: input, shape index: {}]
  %s7 = inlined_call_operand.hbm [shape: f32[8,128], index: 7, kind: output, shape index: {0}]
  %s8 = inlined_call_operand.vmem [shape: s32[8,1], index: 8, kind: output, shape index: {1}]
  %9 = xla_tuple %s7, %s8
  %s10 = sld [smem:[#allocation0]]
  $region62: #{_forward_impl.1} parent=0
    _
  %s12 = ssub.s32 1, %s10
  %s13 = scalar_select 0, %s12, %s10
  $region1: #{_forward_impl.1} parent=0
    #allocation2 [shape = 'u8[4096]{0}', space=vmem, size = 0x1000, scoped, tag = 'input window, operand 0, single buffered']
    #allocation3 [shape = 's32[1]{0}', space=sflag, size = 0x4, scoped, tag = 'scoped memory for _forward_impl.1']
    #allocation4 [shape = 's32[1]{0}', space=sflag, size = 0x4, scoped, tag = 'scoped memory for _forward_impl.1']
    #allocation5 [shape = 'u8[16384]{0}', space=vmem, size = 0x4000, scoped, tag = 'input window, operand 1, single buffered']
    #allocation6 [shape = 's32[1]{0}', space=sflag, size = 0x4, scoped, tag = 'scoped memory for _forward_impl.1']
    #allocation7 [shape = 'u8[65536]{0}', space=vmem, size = 0x10000, scoped, tag = 'input window, operand 3, single buffered']
    #allocation8 [shape = 'u8[65536]{0}', space=vmem, size = 0x10000, scoped, tag = 'input window, operand 5, single buffered']
    #allocation9 [shape = 's32[1]{0}', space=sflag, size = 0x4, scoped, tag = 'scoped memory for _forward_impl.1']
    #allocation10 [shape = 'u8[4096]{0}', space=vmem, size = 0x1000, scoped, tag = 'output window, operand 0, single buffered']
    %14 = vsyncpa [#allocation3], 0
    %15 = vsyncpa [#allocation6], 0
    %16 = vsyncpa [#allocation9], 0
    %17 = vsyncpa [#allocation4], 0
    // Predicated region
    $region2: #{_forward_impl.1} parent=1 // pred_check
      _
    $region3: #{_forward_impl.1} parent=1 // pred_check_branch
      %19 = sbr.rel (0) target = $region5
    $region4: #{_forward_impl.1} parent=1 // pred_region
      %s21 = ssub.s32 128, 128
      %22 = vsyncadd [#allocation3], %s21
      %s24 = sshll.u32 [#allocation2], 4
      %s25 = int_to_ptr.vmem [resolvable:$true] %s24
      %27 = dma.hbm_to_vmem [thread:$0]  %s0, 128, %s25, [#allocation3]
    $region5: #{_forward_impl.1} parent=1 // pred_fallthru
      _
    // Predicated region
    $region6: #{_forward_impl.1} parent=1 // pred_check
      _
    $region7: #{_forward_impl.1} parent=1 // pred_check_branch
      %29 = sbr.rel (0) target = $region9
    $region8: #{_forward_impl.1} parent=1 // pred_region
      %s31 = ssub.s32 512, 512
      %32 = vsyncadd [#allocation6], %s31
      %s33 = sshll.u32 [#allocation5], 4
      %s34 = int_to_ptr.vmem [resolvable:$true] %s33
      %39 = dma.hbm_to_vmem [thread:$0]  %s1, 512, %s34, [#allocation6], 128, 128, 8
    $region9: #{_forward_impl.1} parent=1 // pred_fallthru
      _
    // Predicated region
    $region10: #{_forward_impl.1} parent=1 // pred_check
      _
    $region11: #{_forward_impl.1} parent=1 // pred_check_branch
      %41 = sbr.rel (0) target = $region13
    $region12: #{_forward_impl.1} parent=1 // pred_region
      _
    $region13: #{_forward_impl.1} parent=1 // pred_fallthru
      _
    // Predicated region
    $region14: #{_forward_impl.1} parent=1 // pred_check
      _
    $region15: #{_forward_impl.1} parent=1 // pred_check_branch
      %43 = sbr.rel (0) target = $region17
    $region16: #{_forward_impl.1} parent=1 // pred_region
      %s45 = ssub.s32 2048, 2048
      %46 = vsyncadd [#allocation6], %s45
      %s47 = sshll.u32 [#allocation7], 4
      %s48 = int_to_ptr.vmem [resolvable:$true] %s47
      %53 = dma.hbm_to_vmem [thread:$0]  %s3, 2048, %s48, [#allocation6], 128, 128, 8
    $region17: #{_forward_impl.1} parent=1 // pred_fallthru
      _
    // Predicated region
    $region18: #{_forward_impl.1} parent=1 // pred_check
      _
    $region19: #{_forward_impl.1} parent=1 // pred_check_branch
      %55 = sbr.rel (0) target = $region21
    $region20: #{_forward_impl.1} parent=1 // pred_region
      _
    $region21: #{_forward_impl.1} parent=1 // pred_fallthru
      _
    // Predicated region
    $region22: #{_forward_impl.1} parent=1 // pred_check
      _
    $region23: #{_forward_impl.1} parent=1 // pred_check_branch
      %57 = sbr.rel (0) target = $region25
    $region24: #{_forward_impl.1} parent=1 // pred_region
      %s59 = ssub.s32 2048, 2048
      %60 = vsyncadd [#allocation9], %s59
      %s61 = sshll.u32 [#allocation8], 4
      %s62 = int_to_ptr.vmem [resolvable:$true] %s61
      %67 = dma.hbm_to_vmem [thread:$0]  %s5, 2048, %s62, [#allocation9], 128, 128, 8
    $region25: #{_forward_impl.1} parent=1 // pred_fallthru
      _
    // Predicated region
    $region26: #{_forward_impl.1} parent=1 // pred_check
      _
    $region27: #{_forward_impl.1} parent=1 // pred_check_branch
      %69 = sbr.rel (0) target = $region29
    $region28: #{_forward_impl.1} parent=1 // pred_region
      _
    $region29: #{_forward_impl.1} parent=1 // pred_fallthru
      _
    // Predicated region
    $region30: #{_forward_impl.1} parent=1 // pred_check
      _
    $region31: #{_forward_impl.1} parent=1 // pred_check_branch
      %71 = sbr.rel (0) target = $region33
    $region32: #{_forward_impl.1} parent=1 // pred_region
      %72 = dma.done [#allocation3], 128
    $region33: #{_forward_impl.1} parent=1 // pred_fallthru
      _
    // Predicated region
    $region34: #{_forward_impl.1} parent=1 // pred_check
      _
    $region35: #{_forward_impl.1} parent=1 // pred_check_branch
      %74 = sbr.rel (0) target = $region37
    $region36: #{_forward_impl.1} parent=1 // pred_region
      %75 = dma.done [#allocation6], 512
    $region37: #{_forward_impl.1} parent=1 // pred_fallthru
      _
    // Predicated region
    $region38: #{_forward_impl.1} parent=1 // pred_check
      _
    $region39: #{_forward_impl.1} parent=1 // pred_check_branch
      %77 = sbr.rel (0) target = $region41
    $region40: #{_forward_impl.1} parent=1 // pred_region
      %78 = dma.done [#allocation6], 2048
    $region41: #{_forward_impl.1} parent=1 // pred_fallthru
      _
    // Predicated region
    $region42: #{_forward_impl.1} parent=1 // pred_check
      _
    $region43: #{_forward_impl.1} parent=1 // pred_check_branch
      %80 = sbr.rel (0) target = $region45
    $region44: #{_forward_impl.1} parent=1 // pred_region
      %81 = dma.done [#allocation9], 2048
    $region45: #{_forward_impl.1} parent=1 // pred_fallthru
      _
    %v82 = vld [vmem:[#allocation2] sm:$0xff]
    %v83 = vld [vmem:[#allocation5] sm:$0xff]
    %v84 = vld [vmem:[#allocation5 + $0x8] sm:$0xff]
    %v85 = vld [vmem:[#allocation5 + $0x10] sm:$0xff]
    %v86 = vld [vmem:[#allocation5 + $0x18] sm:$0xff]
    %v87 = vld [vmem:[%s2] sm:$0x1]
    %v89 = vlaneseq
    %v90 = vshrl.u32 %v89, 7
    %v91 = vsub.s32 0, %v90
    %v92 = vrot.slane %v87, %v91
    %vm94 = vcmask 261120
    %v96 = vsel %vm94, %v82, 0
    %98 = vmatprep.subr.mxu0 0.0
    %99 = vmatpush1.msra.mxu0 %v83
    %100 = vmatprep.subr.mxu0 0.0
    %101 = vmatpush1.msra.mxu0 %v84
    %102 = vmatprep.subr.mxu0 0.0
    %103 = vmatpush1.msra.mxu0 %v85
    %104 = vmatprep.subr.mxu0 0.0
    %105 = vmatpush1.msra.mxu0 %v86
    %106 = vmatprep.subr.mxu0 0.0
    %107 = vmatpush1.msra.mxu0 0.0
    %108 = vmatprep.subr.mxu0 0.0
    %109 = vmatpush1.msra.mxu0 0.0
    %110 = vmatprep.subr.mxu0 0.0
    %111 = vmatpush1.msra.mxu0 0.0
    %112 = vmatprep.subr.mxu0 0.0
    %113 = vmatpush1.msra.mxu0 0.0
    %114 = vmatprep.subr.mxu0 0.0
    %115 = vmatpush1.msra.mxu0 0.0
    %116 = vmatprep.subr.mxu0 0.0
    %117 = vmatpush1.msra.mxu0 0.0
    %118 = vmatprep.subr.mxu0 0.0
    %119 = vmatpush1.msra.mxu0 0.0
    %120 = vmatprep.subr.mxu0 0.0
    %121 = vmatpush1.msra.mxu0 0.0
    %122 = vmatprep.subr.mxu0 0.0
    %123 = vmatpush1.msra.mxu0 0.0
    %124 = vmatprep.subr.mxu0 0.0
    %125 = vmatpush1.msra.mxu0 0.0
    %126 = vmatprep.subr.mxu0 0.0
    %127 = vmatpush1.msra.mxu0 0.0
    %128 = vmatprep.subr.mxu0 0.0
    %129 = vmatpush1.msra.mxu0 0.0
    %130 = vmatprep.subr.mxu0 0.0
    %131 = vmatpush1.msra.mxu0 0.0
    %132 = vmatprep.subr.mxu0 0.0
    %133 = vmatpush1.msra.mxu0 0.0
    %134 = vmatprep.subr.mxu0 0.0
    %135 = vmatpush1.msra.mxu0 0.0
    %136 = vmatprep.subr.mxu0 0.0
    %137 = vmatpush1.msra.mxu0 0.0
    %138 = vmatprep.subr.mxu0 0.0
    %139 = vmatpush1.msra.mxu0 0.0
    %140 = vmatprep.subr.mxu0 0.0
    %141 = vmatpush1.msra.mxu0 0.0
    %142 = vmatprep.subr.mxu0 0.0
    %143 = vmatpush1.msra.mxu0 0.0
    %144 = vmatprep.subr.mxu0 0.0
    %145 = vmatpush1.msra.mxu0 0.0
    %146 = vmatprep.subr.mxu0 0.0
    %147 = vmatpush1.msra.mxu0 0.0
    %148 = vmatprep.subr.mxu0 0.0
    %149 = vmatpush1.msra.mxu0 0.0
    %150 = vmatprep.subr.mxu0 0.0
    %151 = vmatpush1.msra.mxu0 0.0
    %152 = vmatprep.subr.mxu0 0.0
    %153 = vmatpush1.msra.mxu0 0.0
    %154 = vmatprep.subr.mxu0 0.0
    %155 = vmatpush1.msra.mxu0 0.0
    %156 = vmatprep.subr.mxu0 0.0
    %157 = vmatpush1.msra.mxu0 0.0
    %158 = vmatprep.subr.mxu0 0.0
    %159 = vmatpush1.msra.mxu0 0.0
    %160 = vmatprep.subr.mxu0 0.0
    %161 = vmatpush1.msra.mxu0 0.0
    %162 = vmatprep.mubr.f32.mxu0 0.0
    %163 = vmatmul.mubr.f32.gmra.mrb[0].mxu0 %v96
    %v164 = vpop.f32.mrb[0].mxu0
    %v165 = vadd.f32 %v92, %v164
    %v166 = vpop.f32.mrb[0].mxu0
    %167 = vdwg.mxu0
    %v168 = vmax.f32 %v165, 0.0
    %v169 = vld [vmem:[#allocation7] sm:$0xff]
    %v170 = vld [vmem:[#allocation7 + $0x8] sm:$0xff]
    %v171 = vld [vmem:[#allocation7 + $0x10] sm:$0xff]
    %v172 = vld [vmem:[#allocation7 + $0x18] sm:$0xff]
    %v173 = vld [vmem:[#allocation7 + $0x20] sm:$0xff]
    %v174 = vld [vmem:[#allocation7 + $0x28] sm:$0xff]
    %v175 = vld [vmem:[#allocation7 + $0x30] sm:$0xff]
    %v176 = vld [vmem:[#allocation7 + $0x38] sm:$0xff]
    %v177 = vld [vmem:[#allocation7 + $0x40] sm:$0xff]
    %v178 = vld [vmem:[#allocation7 + $0x48] sm:$0xff]
    %v179 = vld [vmem:[#allocation7 + $0x50] sm:$0xff]
    %v180 = vld [vmem:[#allocation7 + $0x58] sm:$0xff]
    %v181 = vld [vmem:[#allocation7 + $0x60] sm:$0xff]
    %v182 = vld [vmem:[#allocation7 + $0x68] sm:$0xff]
    %v183 = vld [vmem:[#allocation7 + $0x70] sm:$0xff]
    %v184 = vld [vmem:[#allocation7 + $0x78] sm:$0xff]
    %v185 = vld [vmem:[%s4] sm:$0x1]
    %v187 = vlaneseq
    %v188 = vshrl.u32 %v187, 7
    %v189 = vsub.s32 0, %v188
    %v190 = vrot.slane %v185, %v189
    %192 = vmatprep.subr.mxu0 0.0
    %193 = vmatpush1.msra.mxu0 %v169
    %194 = vmatprep.subr.mxu0 0.0
    %195 = vmatpush1.msra.mxu0 %v170
    %196 = vmatprep.subr.mxu0 0.0
    %197 = vmatpush1.msra.mxu0 %v171
    %198 = vmatprep.subr.mxu0 0.0
    %199 = vmatpush1.msra.mxu0 %v172
    %200 = vmatprep.subr.mxu0 0.0
    %201 = vmatpush1.msra.mxu0 %v173
    %202 = vmatprep.subr.mxu0 0.0
    %203 = vmatpush1.msra.mxu0 %v174
    %204 = vmatprep.subr.mxu0 0.0
    %205 = vmatpush1.msra.mxu0 %v175
    %206 = vmatprep.subr.mxu0 0.0
    %207 = vmatpush1.msra.mxu0 %v176
    %208 = vmatprep.subr.mxu0 0.0
    %209 = vmatpush1.msra.mxu0 %v177
    %210 = vmatprep.subr.mxu0 0.0
    %211 = vmatpush1.msra.mxu0 %v178
    %212 = vmatprep.subr.mxu0 0.0
    %213 = vmatpush1.msra.mxu0 %v179
    %214 = vmatprep.subr.mxu0 0.0
    %215 = vmatpush1.msra.mxu0 %v180
    %216 = vmatprep.subr.mxu0 0.0
    %217 = vmatpush1.msra.mxu0 %v181
    %218 = vmatprep.subr.mxu0 0.0
    %219 = vmatpush1.msra.mxu0 %v182
    %220 = vmatprep.subr.mxu0 0.0
    %221 = vmatpush1.msra.mxu0 %v183
    %222 = vmatprep.subr.mxu0 0.0
    %223 = vmatpush1.msra.mxu0 %v184
    %224 = vmatprep.subr.mxu0 0.0
    %225 = vmatpush1.msra.mxu0 0.0
    %226 = vmatprep.subr.mxu0 0.0
    %227 = vmatpush1.msra.mxu0 0.0
    %228 = vmatprep.subr.mxu0 0.0
    %229 = vmatpush1.msra.mxu0 0.0
    %230 = vmatprep.subr.mxu0 0.0
    %231 = vmatpush1.msra.mxu0 0.0
    %232 = vmatprep.subr.mxu0 0.0
    %233 = vmatpush1.msra.mxu0 0.0
    %234 = vmatprep.subr.mxu0 0.0
    %235 = vmatpush1.msra.mxu0 0.0
    %236 = vmatprep.subr.mxu0 0.0
    %237 = vmatpush1.msra.mxu0 0.0
    %238 = vmatprep.subr.mxu0 0.0
    %239 = vmatpush1.msra.mxu0 0.0
    %240 = vmatprep.subr.mxu0 0.0
    %241 = vmatpush1.msra.mxu0 0.0
    %242 = vmatprep.subr.mxu0 0.0
    %243 = vmatpush1.msra.mxu0 0.0
    %244 = vmatprep.subr.mxu0 0.0
    %245 = vmatpush1.msra.mxu0 0.0
    %246 = vmatprep.subr.mxu0 0.0
    %247 = vmatpush1.msra.mxu0 0.0
    %248 = vmatprep.subr.mxu0 0.0
    %249 = vmatpush1.msra.mxu0 0.0
    %250 = vmatprep.subr.mxu0 0.0
    %251 = vmatpush1.msra.mxu0 0.0
    %252 = vmatprep.subr.mxu0 0.0
    %253 = vmatpush1.msra.mxu0 0.0
    %254 = vmatprep.subr.mxu0 0.0
    %255 = vmatpush1.msra.mxu0 0.0
    %256 = vmatprep.mubr.f32.mxu0 0.0
    %257 = vmatmul.mubr.f32.gmra.mrb[0].mxu0 %v168
    %v258 = vpop.f32.mrb[0].mxu0
    %v259 = vadd.f32 %v190, %v258
    %v260 = vpop.f32.mrb[0].mxu0
    %261 = vdwg.mxu0
    %v262 = vmax.f32 %v259, 0.0
    %v263 = vld [vmem:[#allocation8] sm:$0xff]
    %v264 = vld [vmem:[#allocation8 + $0x8] sm:$0xff]
    %v265 = vld [vmem:[#allocation8 + $0x10] sm:$0xff]
    %v266 = vld [vmem:[#allocation8 + $0x18] sm:$0xff]
    %v267 = vld [vmem:[#allocation8 + $0x20] sm:$0xff]
    %v268 = vld [vmem:[#allocation8 + $0x28] sm:$0xff]
    %v269 = vld [vmem:[#allocation8 + $0x30] sm:$0xff]
    %v270 = vld [vmem:[#allocation8 + $0x38] sm:$0xff]
    %v271 = vld [vmem:[#allocation8 + $0x40] sm:$0xff]
    %v272 = vld [vmem:[#allocation8 + $0x48] sm:$0xff]
    %v273 = vld [vmem:[#allocation8 + $0x50] sm:$0xff]
    %v274 = vld [vmem:[#allocation8 + $0x58] sm:$0xff]
    %v275 = vld [vmem:[#allocation8 + $0x60] sm:$0xff]
    %v276 = vld [vmem:[#allocation8 + $0x68] sm:$0xff]
    %v277 = vld [vmem:[#allocation8 + $0x70] sm:$0xff]
    %v278 = vld [vmem:[#allocation8 + $0x78] sm:$0xff]
    %v279 = vld [vmem:[%s6] sm:$0x1]
    %v281 = vlaneseq
    %v282 = vshrl.u32 %v281, 7
    %v283 = vsub.s32 0, %v282
    %v284 = vrot.slane %v279, %v283
    %286 = vmatprep.subr.mxu0 0.0
    %287 = vmatpush1.msra.mxu0 %v263
    %288 = vmatprep.subr.mxu0 0.0
    %289 = vmatpush1.msra.mxu0 %v264
    %290 = vmatprep.subr.mxu0 0.0
    %291 = vmatpush1.msra.mxu0 %v265
    %292 = vmatprep.subr.mxu0 0.0
    %293 = vmatpush1.msra.mxu0 %v266
    %294 = vmatprep.subr.mxu0 0.0
    %295 = vmatpush1.msra.mxu0 %v267
    %296 = vmatprep.subr.mxu0 0.0
    %297 = vmatpush1.msra.mxu0 %v268
    %298 = vmatprep.subr.mxu0 0.0
    %299 = vmatpush1.msra.mxu0 %v269
    %300 = vmatprep.subr.mxu0 0.0
    %301 = vmatpush1.msra.mxu0 %v270
    %302 = vmatprep.subr.mxu0 0.0
    %303 = vmatpush1.msra.mxu0 %v271
    %304 = vmatprep.subr.mxu0 0.0
    %305 = vmatpush1.msra.mxu0 %v272
    %306 = vmatprep.subr.mxu0 0.0
    %307 = vmatpush1.msra.mxu0 %v273
    %308 = vmatprep.subr.mxu0 0.0
    %309 = vmatpush1.msra.mxu0 %v274
    %310 = vmatprep.subr.mxu0 0.0
    %311 = vmatpush1.msra.mxu0 %v275
    %312 = vmatprep.subr.mxu0 0.0
    %313 = vmatpush1.msra.mxu0 %v276
    %314 = vmatprep.subr.mxu0 0.0
    %315 = vmatpush1.msra.mxu0 %v277
    %316 = vmatprep.subr.mxu0 0.0
    %317 = vmatpush1.msra.mxu0 %v278
    %318 = vmatprep.subr.mxu0 0.0
    %319 = vmatpush1.msra.mxu0 0.0
    %320 = vmatprep.subr.mxu0 0.0
    %321 = vmatpush1.msra.mxu0 0.0
    %322 = vmatprep.subr.mxu0 0.0
    %323 = vmatpush1.msra.mxu0 0.0
    %324 = vmatprep.subr.mxu0 0.0
    %325 = vmatpush1.msra.mxu0 0.0
    %326 = vmatprep.subr.mxu0 0.0
    %327 = vmatpush1.msra.mxu0 0.0
    %328 = vmatprep.subr.mxu0 0.0
    %329 = vmatpush1.msra.mxu0 0.0
    %330 = vmatprep.subr.mxu0 0.0
    %331 = vmatpush1.msra.mxu0 0.0
    %332 = vmatprep.subr.mxu0 0.0
    %333 = vmatpush1.msra.mxu0 0.0
    %334 = vmatprep.subr.mxu0 0.0
    %335 = vmatpush1.msra.mxu0 0.0
    %336 = vmatprep.subr.mxu0 0.0
    %337 = vmatpush1.msra.mxu0 0.0
    %338 = vmatprep.subr.mxu0 0.0
    %339 = vmatpush1.msra.mxu0 0.0
    %340 = vmatprep.subr.mxu0 0.0
    %341 = vmatpush1.msra.mxu0 0.0
    %342 = vmatprep.subr.mxu0 0.0
    %343 = vmatpush1.msra.mxu0 0.0
    %344 = vmatprep.subr.mxu0 0.0
    %345 = vmatpush1.msra.mxu0 0.0
    %346 = vmatprep.subr.mxu0 0.0
    %347 = vmatpush1.msra.mxu0 0.0
    %348 = vmatprep.subr.mxu0 0.0
    %349 = vmatpush1.msra.mxu0 0.0
    %350 = vmatprep.mubr.f32.mxu0 0.0
    %351 = vmatmul.mubr.f32.gmra.mrb[0].mxu0 %v262
    %v352 = vpop.f32.mrb[0].mxu0
    %v353 = vadd.f32 %v284, %v352
    %v354 = vpop.f32.mrb[0].mxu0
    %355 = vdwg.mxu0
    %356 = vst [vmem:[#allocation10] sm:$0xff] %v353
    %v357 = vlaneseq
    %v358 = vand.u32 %v357, 127
    %vm359 = vcmp.lt.s32.totalorder %v358, 10
    %v360 = vsel %vm359, %v353, -inf
    %361 = vmax.xlane.f32.xlu0 %v360
    %v362 = vpop.xlane.xlu0 %361
    %vm363 = vcmp.eq.f32.partialorder %v360, %v362
    %v364 = vsel %vm363, %v358, 128
    %v365 = vand.u32 %v364, 65535
    %v366 = vshra.s32 %v364, 16
    %v367 = vcvt.s32.f32 %v365
    %v368 = vcvt.s32.f32 %v366
    %369 = vmin.xlane.f32.xlu0 %v368
    %v370 = vpop.xlane.xlu0 %369
    %vm371 = vcmp.eq.f32.partialorder %v368, %v370
    %v372 = vsel %vm371, %v367, inf
    %373 = vmin.xlane.f32.xlu0 %v372
    %v374 = vpop.xlane.xlu0 %373
    %v375 = vcvt.f32.s32 %v374
    %v376 = vcvt.f32.s32 %v370
    %v377 = vshll.u32 %v376, 16
    %v378 = vadd.s32 %v377, %v375
    %vm379 = vcmask 7168
    %380 = vst.msk [vmem:[%s8] sm:$0xff] %vm379, %v378
    // Predicated region
    $region46: #{_forward_impl.1} parent=1 // pred_check
      _
    $region47: #{_forward_impl.1} parent=1 // pred_check_branch
      %382 = sbr.rel (0) target = $region49
    $region48: #{_forward_impl.1} parent=1 // pred_region
      %s384 = ssub.s32 128, 128
      %385 = vsyncadd [#allocation4], %s384
      %s387 = sshll.u32 [#allocation10], 4
      %s388 = int_to_ptr.vmem [resolvable:$true] %s387
      %390 = dma.vmem_to_hbm [thread:$0]  %s388, 128, %s7, [#allocation4]
    $region49: #{_forward_impl.1} parent=1 // pred_fallthru
      _
    // Predicated region
    $region50: #{_forward_impl.1} parent=1 // pred_check
      _
    $region51: #{_forward_impl.1} parent=1 // pred_check_branch
      %392 = sbr.rel (0) target = $region53
    $region52: #{_forward_impl.1} parent=1 // pred_region
      _
    $region53: #{_forward_impl.1} parent=1 // pred_fallthru
      _
    // Predicated region
    $region54: #{_forward_impl.1} parent=1 // pred_check
      _
    $region55: #{_forward_impl.1} parent=1 // pred_check_branch
      %394 = sbr.rel (0) target = $region57
    $region56: #{_forward_impl.1} parent=1 // pred_region
      %395 = dma.done [#allocation4], 128
    $region57: #{_forward_impl.1} parent=1 // pred_fallthru
      _
    // Predicated region
    $region58: #{_forward_impl.1} parent=1 // pred_check
      _
    $region59: #{_forward_impl.1} parent=1 // pred_check_branch
      %397 = sbr.rel (0) target = $region61
    $region60: #{_forward_impl.1} parent=1 // pred_region
      _
    $region61: #{_forward_impl.1} parent=1 // pred_fallthru
      _
    %398 = vsyncpa [#allocation3], 1
    %399 = vsyncpa [#allocation6], 1
    %400 = vsyncpa [#allocation9], 1
    %401 = vsyncpa [#allocation4], 1

</llo_original>
